<compile_context>
chip_gen: v7x
topology: tpu7x:2x2x1
jax: 0.10.0
libtpu: 0.0.40
codegen_flags: <defaults>
</compile_context>

<pallas_src>
import jax
import jax.numpy as jnp
import numpy as np
from jax.experimental import pallas as pl
from jax.experimental.pallas import tpu as pltpu


def _round_up(a, b):
    return ((a + b - 1) // b) * b


# ----------------------------------------------------------------------------
# Kernel 1: impulse construction (elementwise; exp/sigmoid run on the EUP).
#   impulse = noise * exp(-softplus(-decay) * t * 500) * sigmoid(wet)
#   impulse[0] = 1
# noise/t are pre-padded with zeros to the frame size F (lane-dense layout).
# ----------------------------------------------------------------------------
def _impulse_kernel(decay_ref, wet_ref, noise_ref, t_ref, imp_ref):
    dec = decay_ref[...]          # (1, 1)
    wet = wet_ref[...]            # (1, 1)
    t = t_ref[...]                # (1, F)
    noise = noise_ref[...]        # (1, F)

    env = jnp.exp(-jax.nn.softplus(-dec) * t * 500.0)          # (1, F)
    imp = noise * env * jax.nn.sigmoid(wet)                    # (1, F)

    lane = jax.lax.broadcasted_iota(jnp.int32, imp.shape, 1)
    imp_ref[...] = jnp.where(lane == 0, jnp.float32(1.0), imp)


def build_impulse_pallas(decay, wet, noise_row, t_row):
    """decay, wet: (1,1) f32; noise_row, t_row: (1, F) f32 -> (1, F) f32."""
    F = noise_row.shape[-1]
    return pl.pallas_call(
        _impulse_kernel,
        out_shape=jax.ShapeDtypeStruct((1, F), jnp.float32),
        in_specs=[
            pl.BlockSpec(memory_space=pltpu.MemorySpace.VMEM),   # decay (1,1)
            pl.BlockSpec(memory_space=pltpu.MemorySpace.VMEM),   # wet   (1,1)
            pl.BlockSpec(memory_space=pltpu.MemorySpace.VMEM),   # noise (1,F)
            pl.BlockSpec(memory_space=pltpu.MemorySpace.VMEM),   # t     (1,F)
        ],
        out_specs=pl.BlockSpec(memory_space=pltpu.MemorySpace.VMEM),
    )(decay, wet, noise_row, t_row)


# ----------------------------------------------------------------------------
# Kernel 2: banded causal convolution — one MXU matmul per row tile.
#   Y[r, :] = Xcat[r, :] @ Tband
# Row r is (batch b, frame j); Xcat row = [frame j-1 | frame j] (zeros for the
# previous frame when j = 0).  Tband is the (2F, F) Toeplitz band, fetched once
# and resident in VMEM (constant index_map).
# ----------------------------------------------------------------------------
def _banded_conv_kernel(xcat_ref, band_ref, o_ref):
    acc = jnp.dot(xcat_ref[...], band_ref[...],
                  preferred_element_type=jnp.float32)
    o_ref[...] = acc.astype(o_ref.dtype)


def banded_conv_pallas(Xcat, Tband, tm):
    """Xcat: (M, 2F) f32; Tband: (2F, F) f32 -> (M, F) f32."""
    M, K = Xcat.shape
    F = K // 2
    assert M % tm == 0
    grid = (M // tm,)

    # VMEM budget: double-buffered Xcat/out row tiles + the resident band tile
    # (assume it is double-buffered too, to be safe).
    needed = 4 * (2 * tm * K + 2 * tm * F + 2 * K * F) + (2 << 20)
    cp_kwargs = dict(dimension_semantics=("parallel",))
    if needed > (24 << 20):
        cp_kwargs["vmem_limit_bytes"] = min(needed, 64 << 20)

    return pl.pallas_call(
        _banded_conv_kernel,
        out_shape=jax.ShapeDtypeStruct((M, F), jnp.float32),
        grid=grid,
        in_specs=[
            pl.BlockSpec((tm, K), lambda i: (i, 0)),   # [prev | current] frames
            pl.BlockSpec((K, F), lambda i: (0, 0)),    # Toeplitz band (resident)
        ],
        out_specs=pl.BlockSpec((tm, F), lambda i: (i, 0)),
        compiler_params=pltpu.CompilerParams(**cp_kwargs),
    )(Xcat, Tband)


# ----------------------------------------------------------------------------
# Module wrapper (parameter setup + O(N)/O(F^2) glue in plain JAX).
# ----------------------------------------------------------------------------
class ReverbPallas:
    def __init__(self, length, sampling_rate, initial_wet=0.0, initial_decay=5.0,
                 key=None, frame=None, row_tile=512):
        self.length = length
        self.sampling_rate = sampling_rate
        key = jax.random.PRNGKey(0) if key is None else key
        # torch.rand(length)*2 - 1, unsqueezed to (length, 1)
        self.noise = jax.random.uniform(
            key, (length, 1), minval=-1.0, maxval=1.0, dtype=jnp.float32)
        self.decay = jnp.float32(initial_decay)
        self.wet = jnp.float32(initial_wet)
        # t buffer: (1, length, 1)
        self.t = (jnp.arange(length, dtype=jnp.float32) / sampling_rate
                  ).reshape(1, -1, 1)
        # Frame size: multiple of 128 lanes and >= length so a single previous
        # frame carries all the history the band needs.
        # TODO(synk): impulses much longer than ~2048 taps should switch to a
        # K-reduction over tap blocks instead of growing F (band = 2*F^2 f32).
        self.frame = frame if frame is not None else max(128, _round_up(length, 128))
        assert self.length <= self.frame
        self.row_tile = row_tile
        # NOTE: on v6e/v7x the Xcat/Tband operands could be cast to bf16
        # (f32 accumulation kept) for ~2-3x MXU throughput; kept f32 here to
        # stay well inside the 1e-3 reference tolerance.

    def build_impulse(self):
        F = self.frame
        noise_row = jnp.zeros((1, F), jnp.float32).at[0, :self.length].set(
            self.noise[:, 0])
        t_row = jnp.zeros((1, F), jnp.float32).at[0, :self.length].set(
            self.t[0, :, 0])
        dec = jnp.reshape(self.decay, (1, 1)).astype(jnp.float32)
        wet = jnp.reshape(self.wet, (1, 1)).astype(jnp.float32)
        return build_impulse_pallas(dec, wet, noise_row, t_row)      # (1, F)

    def _band_matrix(self, imp_row):
        """(2F, F) Toeplitz band: Tband[k, m] = h[m - k + F] where the shift is
        in range; h is zero beyond `length`, so the band cutoff comes for free.
        Rows [0, F) multiply the previous frame, rows [F, 2F) the current."""
        F = self.frame
        h = imp_row[0]                                               # (F,)
        k_idx = jnp.arange(2 * F, dtype=jnp.int32)[:, None]
        m_idx = jnp.arange(F, dtype=jnp.int32)[None, :]
        d = m_idx - k_idx + F
        valid = jnp.logical_and(d >= 0, d < F)
        return jnp.where(valid, h[jnp.clip(d, 0, F - 1)], jnp.float32(0.0))

    def __call__(self, x):
        """x: (B, lenx, 1) float32 -> (B, lenx, 1) float32."""
        B, lenx, _ = x.shape
        assert lenx >= self.length, "module requires lenx >= length"
        F = self.frame

        imp = self.build_impulse()                                   # (1, F)
        Tband = self._band_matrix(imp)                               # (2F, F)

        # overlap-save framing: fold time frames into the matmul M dimension.
        nf = (lenx + F - 1) // F
        Tlen = nf * F
        x2d = jnp.pad(x[..., 0].astype(jnp.float32), ((0, 0), (0, Tlen - lenx)))
        Xf = x2d.reshape(B, nf, F)
        Xprev_f = jnp.concatenate(
            [jnp.zeros((B, 1, F), jnp.float32), Xf[:, :-1]], axis=1)
        Xcat = jnp.concatenate([Xprev_f, Xf], axis=-1).reshape(B * nf, 2 * F)

        M = B * nf
        if M >= self.row_tile:
            tm = self.row_tile
            Mp = _round_up(M, tm)
            if Mp > M:
                Xcat = jnp.pad(Xcat, ((0, Mp - M), (0, 0)))
        else:
            tm = M          # single full-extent row block (full dims are legal)
            Mp = M

        Y = banded_conv_pallas(Xcat, Tband, tm)                      # (Mp, F)
        y = Y[:M].reshape(B, Tlen)[:, :lenx]
        return y[..., None]


# ----------------------------------------------------------------------------
# Numpy reference replicating the PyTorch FFT path exactly.
# ----------------------------------------------------------------------------
def ref_forward(x, noise, decay, wet, t, length):
    x = np.asarray(x, dtype=np.float64)
    noise = np.asarray(noise, dtype=np.float64)
    t = np.asarray(t, dtype=np.float64)
    decay = float(decay)
    wet = float(wet)
    sp = np.log1p(np.exp(-decay))                        # softplus(-decay)
    env = np.exp(-sp * t * 500.0)                        # (1, length, 1)
    imp = noise[None] * env                              # (1, length, 1)
    imp = imp * (1.0 / (1.0 + np.exp(-wet)))
    imp[:, 0] = 1.0
    lenx = x.shape[1]
    imp = np.pad(imp, ((0, 0), (0, lenx - length), (0, 0)))
    sig = x[..., 0]                                      # (B, lenx)
    ker = imp[..., 0]                                    # (1, lenx)
    sig = np.pad(sig, ((0, 0), (0, lenx)))
    ker = np.pad(ker, ((0, 0), (lenx, 0)))
    out = np.fft.irfft(np.fft.rfft(sig) * np.fft.rfft(ker))
    out = out[..., out.shape[-1] // 2:]
    return out[..., None]


if __name__ == "__main__":
    key = jax.random.PRNGKey(0)
    k_noise, k_x1, k_x2 = jax.random.split(key, 3)

    length, sampling_rate = 64, 16000
    reverb = ReverbPallas(length, sampling_rate,
                          initial_wet=0.0, initial_decay=5.0, key=k_noise)

    # Case 1: single frame (B=2, lenx=128).
    B, lenx = 2, 128
    x = jax.random.normal(k_x1, (B, lenx, 1), dtype=jnp.float32)
    y = jax.block_until_ready(reverb(x))
    y_ref = ref_forward(x, reverb.noise, reverb.decay, reverb.wet,
                        reverb.t, length)
    assert y.shape == (B, lenx, 1)
    assert np.allclose(np.asarray(y), y_ref, rtol=1e-3, atol=1e-3), \
        "Pallas reverb does not match FFT reference (single frame)"

    # Case 2: multiple frames (exercises the overlap-save / previous-frame path).
    B2, lenx2 = 2, 384
    x2 = jax.random.normal(k_x2, (B2, lenx2, 1), dtype=jnp.float32)
    y2 = jax.block_until_ready(reverb(x2))
    y2_ref = ref_forward(x2, reverb.noise, reverb.decay, reverb.wet,
                         reverb.t, length)
    assert y2.shape == (B2, lenx2, 1)
    assert np.allclose(np.asarray(y2), y2_ref, rtol=1e-3, atol=1e-3), \
        "Pallas reverb does not match FFT reference (multi frame)"

    print("KERNEL_OK")
</pallas_src>

<mosaic_0001>
module attributes {stable_mosaic.version = 11 : i64} {
  func.func @_impulse_kernel(%arg0: memref<1x1xf32, #tpu.memory_space<vmem>>, %arg1: memref<1x1xf32, #tpu.memory_space<vmem>>, %arg2: memref<1x128xf32, #tpu.memory_space<vmem>>, %arg3: memref<1x128xf32, #tpu.memory_space<vmem>>, %arg4: memref<1x128xf32, #tpu.memory_space<vmem>>) attributes {dimension_semantics = [], scalar_prefetch = 0 : i64, scratch_operands = 0 : i64, tpu.core_type = #tpu.core_type<tc>} {
    %c0 = arith.constant 0 : index
    %c0_0 = arith.constant 0 : index
    %0 = vector.load %arg0[%c0, %c0_0] : memref<1x1xf32, #tpu.memory_space<vmem>>, vector<1x1xf32>
    %c0_1 = arith.constant 0 : index
    %c0_2 = arith.constant 0 : index
    %1 = vector.load %arg1[%c0_1, %c0_2] : memref<1x1xf32, #tpu.memory_space<vmem>>, vector<1x1xf32>
    %c0_3 = arith.constant 0 : index
    %c0_4 = arith.constant 0 : index
    %2 = vector.load %arg3[%c0_3, %c0_4] : memref<1x128xf32, #tpu.memory_space<vmem>>, vector<1x128xf32>
    %c0_5 = arith.constant 0 : index
    %c0_6 = arith.constant 0 : index
    %3 = vector.load %arg2[%c0_5, %c0_6] : memref<1x128xf32, #tpu.memory_space<vmem>>, vector<1x128xf32>
    %cst = arith.constant 0.000000e+00 : f32
    %4 = vector.broadcast %cst : f32 to vector<1x1xf32>
    %5 = arith.subf %4, %0 : vector<1x1xf32>
    %cst_7 = arith.constant 0.000000e+00 : f32
    %6 = vector.broadcast %cst_7 : f32 to vector<1x1xf32>
    %7 = arith.maximumf %5, %6 : vector<1x1xf32>
    %8 = vector.broadcast %cst_7 : f32 to vector<1x1xf32>
    %9 = arith.subf %5, %8 : vector<1x1xf32>
    %10 = arith.cmpf one, %9, %9 : vector<1x1xf32>
    %11 = vector.broadcast %cst_7 : f32 to vector<1x1xf32>
    %12 = arith.addf %5, %11 : vector<1x1xf32>
    %13 = math.absf %9 : vector<1x1xf32>
    %cst_8 = arith.constant 0.000000e+00 : f32
    %14 = vector.broadcast %cst_8 : f32 to vector<1x1xf32>
    %15 = arith.subf %14, %13 : vector<1x1xf32>
    %16 = math.exp %15 : vector<1x1xf32>
    %17 = math.log1p %16 : vector<1x1xf32>
    %18 = arith.addf %7, %17 : vector<1x1xf32>
    %19 = arith.select %10, %12, %18 : vector<1x1xi1>, vector<1x1xf32>
    %cst_9 = arith.constant 0.000000e+00 : f32
    %20 = vector.broadcast %cst_9 : f32 to vector<1x1xf32>
    %21 = arith.subf %20, %19 : vector<1x1xf32>
    %22 = vector.broadcast %21 : vector<1x1xf32> to vector<1x128xf32>
    %23 = arith.mulf %22, %2 : vector<1x128xf32>
    %cst_10 = arith.constant 5.000000e+02 : f32
    %24 = vector.broadcast %cst_10 : f32 to vector<1x128xf32>
    %25 = arith.mulf %23, %24 : vector<1x128xf32>
    %26 = math.exp %25 : vector<1x128xf32>
    %27 = arith.mulf %3, %26 : vector<1x128xf32>
    %28 = arith.negf %1 : vector<1x1xf32>
    %29 = math.exp %28 : vector<1x1xf32>
    %cst_11 = arith.constant 1.000000e+00 : f32
    %30 = vector.broadcast %cst_11 : f32 to vector<1x1xf32>
    %31 = arith.addf %30, %29 : vector<1x1xf32>
    %32 = arith.divf %30, %31 : vector<1x1xf32>
    %33 = vector.broadcast %32 : vector<1x1xf32> to vector<1x128xf32>
    %34 = arith.mulf %27, %33 : vector<1x128xf32>
    %35 = tpu.iota {dimensions = array<i32: 1>} : vector<1x128xi32>
    %c0_i32 = arith.constant 0 : i32
    %36 = vector.broadcast %c0_i32 : i32 to vector<1x128xi32>
    %37 = arith.cmpi eq, %35, %36 : vector<1x128xi32>
    %cst_12 = arith.constant 1.000000e+00 : f32
    %38 = vector.broadcast %cst_12 : f32 to vector<1x128xf32>
    %39 = arith.select %37, %38, %34 : vector<1x128xi1>, vector<1x128xf32>
    %c0_13 = arith.constant 0 : index
    %c0_14 = arith.constant 0 : index
    %40 = vector.load %arg4[%c0_13, %c0_14] : memref<1x128xf32, #tpu.memory_space<vmem>>, vector<1x128xf32>
    tpu.vector_store %arg4[%c0_13, %c0_14], %39 {strides = array<i32>} : memref<1x128xf32, #tpu.memory_space<vmem>>, vector<1x128xf32>,
    return
  }
}

</mosaic_0001>

<llo_original>
// kernel: tpu_custom_call.1
$region0: #{tpu_custom_call.1}
  #allocation0 [shape = 'u32[]', space=smem, size = 0x4, offset = 0x4, fixed_abs, tag = 'smem constant byte address 0x4 - core index']
  #allocation1 [shape = 'u32[144,128]{1,0:T(1,128)}', space=vmem, size = 0x12000, scoped, tag = 'internal scratch']
  #allocation2 [shape = 'f32[1,1]{1,0:T(1,128)S(1)}', space=vmem, size = 0x200, scoped, tag = 'scoped memory for tpu_custom_call.1']
  #allocation3 [shape = 'f32[1,1]{1,0:T(1,128)S(1)}', space=vmem, size = 0x200, scoped, tag = 'scoped memory for tpu_custom_call.1']
  %s0 = inlined_call_operand.<no memory space> [shape: f32[1,1], index: 0, kind: input, shape index: {}]
  %s1 = inlined_call_operand.<no memory space> [shape: f32[1,1], index: 1, kind: input, shape index: {}]
  %s2 = inlined_call_operand.vmem [shape: f32[1,128], index: 2, kind: input, shape index: {}]
  %s3 = inlined_call_operand.vmem [shape: f32[1,128], index: 3, kind: input, shape index: {}]
  %s4 = inlined_call_operand.hbm [shape: f32[1,128], index: 4, kind: output, shape index: {}]
  %s5 = sld [smem:[#allocation0]]
  $region26: #{tpu_custom_call.1} parent=0
    _
  %s7 = ssub.s32 1, %s5
  %s8 = scalar_select 0, %s7, %s5
  %v9 = vstv %s0
  %10 = vst [vmem:[#allocation2] sm:$0x1] %v9
  %v11 = vstv %s1
  %12 = vst [vmem:[#allocation3] sm:$0x1] %v11
  $region1: #{tpu_custom_call.1} parent=0
    #allocation4 [shape = 'u8[512]{0}', space=vmem, size = 0x400, scoped, tag = 'output window, operand 0, single buffered']
    #allocation5 [shape = 's32[1]{0}', space=sflag, size = 0x4, scoped, tag = 'scoped memory for tpu_custom_call.1']
    %13 = vsyncpa [#allocation5], 0
    // Predicated region
    $region2: #{tpu_custom_call.1} parent=1 // pred_check
      _
    $region3: #{tpu_custom_call.1} parent=1 // pred_check_branch
      %15 = sbr.rel (0) target = $region5
    $region4: #{tpu_custom_call.1} parent=1 // pred_region
      _
    $region5: #{tpu_custom_call.1} parent=1 // pred_fallthru
      _
    // Predicated region
    $region6: #{tpu_custom_call.1} parent=1 // pred_check
      _
    $region7: #{tpu_custom_call.1} parent=1 // pred_check_branch
      %17 = sbr.rel (0) target = $region9
    $region8: #{tpu_custom_call.1} parent=1 // pred_region
      _
    $region9: #{tpu_custom_call.1} parent=1 // pred_fallthru
      _
    // Predicated region
    $region10: #{tpu_custom_call.1} parent=1 // pred_check
      _
    $region11: #{tpu_custom_call.1} parent=1 // pred_check_branch
      %19 = sbr.rel (0) target = $region13
    $region12: #{tpu_custom_call.1} parent=1 // pred_region
      _
    $region13: #{tpu_custom_call.1} parent=1 // pred_fallthru
      _
    // Predicated region
    $region14: #{tpu_custom_call.1} parent=1 // pred_check
      _
    $region15: #{tpu_custom_call.1} parent=1 // pred_check_branch
      %21 = sbr.rel (0) target = $region17
    $region16: #{tpu_custom_call.1} parent=1 // pred_region
      _
    $region17: #{tpu_custom_call.1} parent=1 // pred_fallthru
      _
    %v22 = vld [vmem:[#allocation2] sm:$0x1]
    %v23 = vld [vmem:[#allocation3] sm:$0x1]
    %v24 = vld [vmem:[%s3] sm:$0x1]
    %v25 = vld [vmem:[%s2] sm:$0x1]
    %v26 = vsub.f32 0.0, %v22
    %v27 = vmax.f32 %v26, 0.0
    %vm28 = vcmp.ne.f32.partialorder %v26, %v26
    %v29 = vadd.f32 %v26, 0.0
    %v30 = vand.u32 2147483647, %v26
    %v31 = vsub.f32 0.0, %v30
    %v32 = vmul.f32 %v31, 1.442695
    %v33 = vpow.pop %v32
    %v34 = vadd.f32 %v33, 1.0
    %v35 = vlog2.pop %v34
    %v36 = vmul.f32 %v35, 0.6931472
    %v37 = vmul.f32 -0.5, %v33
    %v38 = vadd.f32 %v37, 1.0
    %v39 = vmul.f32 %v38, %v33
    %v40 = vand.u32 2147483647, %v33
    %vm41 = vcmp.lt.f32.partialorder %v40, 0.0004427343
    %v42 = vsel %vm41, %v39, %v36
    %v43 = vadd.f32 %v27, %v42
    %v44 = vsel %vm28, %v29, %v43
    %v45 = vsub.f32 0.0, %v44
    %47 = vset.pattern.permute.xlu0 0
    %48 = vperm.xlu0 %47, %v45
    %v49 = vpop.permute.xlu0 %48
    %v51 = vlaneseq
    %v52 = vshrl.u32 %v51, 7
    %v53 = vsub.s32 0, %v52
    %v54 = vrot.slane %v49, %v53
    %v55 = vmul.f32 %v54, %v24
    %v56 = vmul.f32 %v55, 500.0
    %v57 = vmul.f32 %v56, 1.442695
    %v58 = vpow.pop %v57
    %v59 = vmul.f32 %v25, %v58
    %v60 = vxor.u32 %v23, 2147483648
    %v61 = vmul.f32 %v60, 1.442695
    %v62 = vpow.pop %v61
    %v63 = vadd.f32 %v62, 1.0
    %v64 = vrcp.pop %v63
    %v65 = vmul.f32 1.0, %v64
    %67 = vset.pattern.permute.xlu0 0
    %68 = vperm.xlu0 %67, %v65
    %v69 = vpop.permute.xlu0 %68
    %v71 = vlaneseq
    %v72 = vshrl.u32 %v71, 7
    %v73 = vsub.s32 0, %v72
    %v74 = vrot.slane %v69, %v73
    %v75 = vmul.f32 %v59, %v74
    %v76 = vlaneseq
    %v77 = vand.u32 %v76, 127
    %vm78 = vcmp.eq.s32.totalorder %v77, 0
    %v79 = vsel %vm78, 1.0, %v75
    %80 = vst [vmem:[#allocation4] sm:$0x1] %v79
    // Predicated region
    $region18: #{tpu_custom_call.1} parent=1 // pred_check
      _
    $region19: #{tpu_custom_call.1} parent=1 // pred_check_branch
      %82 = sbr.rel (0) target = $region21
    $region20: #{tpu_custom_call.1} parent=1 // pred_region
      %s84 = ssub.s32 16, 16
      %85 = vsyncadd [#allocation5], %s84
      %s87 = sshll.u32 [#allocation4], 4
      %s88 = int_to_ptr.vmem [resolvable:$true] %s87
      %90 = dma.vmem_to_hbm [thread:$0]  %s88, 16, %s4, [#allocation5]
    $region21: #{tpu_custom_call.1} parent=1 // pred_fallthru
      _
    // Predicated region
    $region22: #{tpu_custom_call.1} parent=1 // pred_check
      _
    $region23: #{tpu_custom_call.1} parent=1 // pred_check_branch
      %92 = sbr.rel (0) target = $region25
    $region24: #{tpu_custom_call.1} parent=1 // pred_region
      %93 = dma.done [#allocation5], 16
    $region25: #{tpu_custom_call.1} parent=1 // pred_fallthru
      _
    %94 = vsyncpa [#allocation5], 1

</llo_original>
